<compile_context>
chip_gen: v6e
topology: v6e:2x2x1
jax: 0.10.0
libtpu: 0.0.40
codegen_flags: <defaults>
</compile_context>

<pallas_src>
import jax
import jax.numpy as jnp
from jax.experimental import pallas as pl
from jax.experimental.pallas import tpu as pltpu


def _round_up(x: int, m: int) -> int:
    return ((x + m - 1) // m) * m


def _pick_tile_m(M, C_in, C_out, x_item, w_item, o_item):
    # sublane granularity: 8 rows for 32-bit, 16 for bf16, 32 for int8
    sub = max(8, 32 // x_item, 32 // o_item)
    resident = C_in * C_out * w_item + C_out * 4
    # double-buffered x / out blocks + ~3 f32 softmax temporaries per row
    per_row = 2 * C_in * x_item + 2 * C_out * o_item + 3 * C_out * 4
    budget = (36 << 20) - resident            # fits v7x 64 MiB / v5e w/ explicit limit
    tile = min(1024, max(sub, budget // max(per_row, 1)))
    tile = max(sub, (tile // sub) * sub)      # round down to sublane multiple
    if M > sub:                               # keep >= 2 grid steps for v7x's 2 TCs
        tile = min(tile, _round_up(pl.cdiv(M, 2), sub))
    return int(min(tile, _round_up(M, sub)))


def _ctc_head_kernel(x_ref, w_ref, b_ref, o_ref):
    # x_ref: (TILE_M, C_in), w_ref: (C_in, C_out), b_ref: (1, C_out) f32,
    # o_ref: (TILE_M, C_out)
    x = x_ref[...].astype(w_ref.dtype)                        # bf16 MXU operands
    logits = jnp.dot(x, w_ref[...], preferred_element_type=jnp.float32)
    logits = logits + b_ref[...]                              # f32 bias row-broadcast

    # numerically stable single-pass softmax over the resident C_out row
    row_max = jnp.max(logits, axis=-1, keepdims=True)
    e = jnp.exp(logits - row_max)
    denom = jnp.sum(e, axis=-1, keepdims=True)
    probs = e * pl.reciprocal(denom, approx=True)             # EUP, not VALU divide

    o_ref[...] = probs.astype(o_ref.dtype)


def prepare_ctc_head_params(weight, bias, *, compute_dtype=jnp.bfloat16):
    """One-time init-step weight prep (do NOT call per inference step).

    weight: (C_out, C_in) PyTorch nn.Linear layout -> (C_in, C_out) compute_dtype
    bias:   (C_out,)                               -> (1, C_out) float32
    """
    w_ck = jnp.asarray(weight).T.astype(compute_dtype)
    b_1c = jnp.asarray(bias).astype(jnp.float32).reshape(1, -1)
    return w_ck, b_1c


def ctc_head_forward(x, w_ck, b_1c, *, out_dtype=None, tile_m=None, interpret=False):
    """Fused Linear + softmax (CTCHead eval forward).

    x:    (B, T, C_in)
    w_ck: (C_in, C_out) prepared weight (see prepare_ctc_head_params)
    b_1c: (1, C_out)    prepared f32 bias
    returns (B, T, C_out) softmax probabilities (dtype of x unless out_dtype given;
    pass out_dtype=jnp.bfloat16 to halve the dominant output writeback if the
    downstream consumer tolerates it).
    """
    B, T, C_in = x.shape
    Cw, C_out = w_ck.shape
    assert Cw == C_in, (Cw, C_in)
    M = B * T
    out_dtype = x.dtype if out_dtype is None else out_dtype

    x_item = jnp.dtype(x.dtype).itemsize
    w_item = jnp.dtype(w_ck.dtype).itemsize
    o_item = jnp.dtype(out_dtype).itemsize

    if tile_m is None:
        tile_m = _pick_tile_m(M, C_in, C_out, x_item, w_item, o_item)

    x2 = x.reshape(M, C_in)                     # free: contiguous, metadata only
    grid = (pl.cdiv(M, tile_m),)                # boundary block masked by Pallas

    resident = C_in * C_out * w_item + C_out * 4
    blocks = 2 * tile_m * (C_in * x_item + C_out * o_item)
    temps = 4 * tile_m * C_out * 4              # f32 logits / exp / probs headroom
    vmem_limit = int(min(max(int((resident + blocks + temps) * 1.25) + (2 << 20),
                             16 << 20), 48 << 20))

    cost = pl.CostEstimate(
        flops=2 * M * C_in * C_out,
        transcendentals=M * C_out,
        bytes_accessed=(M * C_in * x_item + C_in * C_out * w_item
                        + C_out * 4 + M * C_out * o_item),
    )

    def build(single_buffer_weights):
        resident_mode = ({"pipeline_mode": pl.Buffered(1)}
                         if single_buffer_weights else {})
        grid_spec = pltpu.PrefetchScalarGridSpec(
            num_scalar_prefetch=0,
            grid=grid,
            in_specs=[
                pl.BlockSpec((tile_m, C_in), lambda i: (i, 0)),                   # stream x
                pl.BlockSpec((C_in, C_out), lambda i: (0, 0), **resident_mode),   # resident W
                pl.BlockSpec((1, C_out), lambda i: (0, 0), **resident_mode),      # resident b
            ],
            out_specs=pl.BlockSpec((tile_m, C_out), lambda i: (i, 0)),
        )
        return pl.pallas_call(
            _ctc_head_kernel,
            out_shape=jax.ShapeDtypeStruct((M, C_out), out_dtype),
            grid_spec=grid_spec,
            compiler_params=pltpu.CompilerParams(
                dimension_semantics=("parallel",),   # independent rows -> 2-TC sharding
                vmem_limit_bytes=vmem_limit,
            ),
            cost_estimate=cost,
            interpret=interpret,
        )

    try:
        out = build(True)(x2, w_ck, b_1c)
    except Exception:
        # This JAX build rejects pl.Buffered(1); fall back to default
        # double-buffering of the (still resident) weight and bias.
        out = build(False)(x2, w_ck, b_1c)

    return out.reshape(B, T, C_out)             # free: contiguous, metadata only


# TODO(synk): mid_channels (fc1->fc2), return_feats=True, and training-mode
# (no-softmax) branches of CTCHead are not kernelized; only the default eval
# path (fc -> softmax) is.
# TODO(synk): for very large vocabs (C_out >~ 16K) on v7x, add a C_out grid
# axis with an online (flash-style) softmax instead of full-row residency.


if __name__ == "__main__":
    key = jax.random.PRNGKey(0)
    B, T, C_in, C_out = 2, 8, 32, 80
    k1, k2, k3 = jax.random.split(key, 3)

    x = jax.random.normal(k1, (B, T, C_in), dtype=jnp.float32)
    weight = jax.random.normal(k2, (C_out, C_in), dtype=jnp.float32) * 0.05
    bias = jax.random.normal(k3, (C_out,), dtype=jnp.float32) * 0.05

    # one-time init-step prep (hoisted out of the per-call path)
    w_ck, b_1c = prepare_ctc_head_params(weight, bias)

    probs = ctc_head_forward(x, w_ck, b_1c)
    probs = jax.block_until_ready(probs)

    # pure-JAX reference
    ref = jax.nn.softmax(x @ weight.T + bias, axis=-1)

    assert probs.shape == (B, T, C_out), probs.shape
    assert bool(jnp.allclose(jnp.sum(probs, axis=-1), 1.0, atol=1e-2)), "rows not normalized"
    assert bool(jnp.allclose(probs, ref, atol=2e-2, rtol=2e-2)), "mismatch vs reference softmax"

    print("KERNEL_OK")
</pallas_src>

<mosaic_0001>
module attributes {stable_mosaic.version = 11 : i64} {
  func.func @_ctc_head_kernel(%arg0: i32, %arg1: memref<8x32xf32, #tpu.memory_space<vmem>>, %arg2: memref<32x80xbf16, #tpu.memory_space<vmem>>, %arg3: memref<1x80xf32, #tpu.memory_space<vmem>>, %arg4: memref<8x80xf32, #tpu.memory_space<vmem>>) attributes {dimension_semantics = [#tpu.dimension_semantics<parallel>], iteration_bounds = array<i64: 2>, scalar_prefetch = 0 : i64, scratch_operands = 0 : i64, tpu.core_type = #tpu.core_type<tc>, window_params = [{transform_indices = @transform_0, window_bounds = array<i64: 8, 32>}, {pipeline_mode = #tpu.pipeline_mode<synchronous>, transform_indices = @transform_1, window_bounds = array<i64: 32, 80>}, {pipeline_mode = #tpu.pipeline_mode<synchronous>, transform_indices = @transform_2, window_bounds = array<i64: 1, 80>}, {transform_indices = @transform_3, window_bounds = array<i64: 8, 80>}]} {
    %c0 = arith.constant 0 : index
    %c0_0 = arith.constant 0 : index
    %0 = vector.load %arg1[%c0, %c0_0] : memref<8x32xf32, #tpu.memory_space<vmem>>, vector<8x32xf32>
    %1 = arith.truncf %0 : vector<8x32xf32> to vector<8x32xbf16>
    %c0_1 = arith.constant 0 : index
    %c0_2 = arith.constant 0 : index
    %2 = vector.load %arg2[%c0_1, %c0_2] : memref<32x80xbf16, #tpu.memory_space<vmem>>, vector<32x80xbf16>
    %cst = arith.constant dense<0.000000e+00> : vector<8x80xf32>
    %3 = tpu.matmul %1, %2, %cst {dimension_numbers = #tpu.dot_dimension_numbers<[1], [0], [0], [1], [0, 0, 1, 1], [], []>} : vector<8x32xbf16>, vector<32x80xbf16>, vector<8x80xf32> -> vector<8x80xf32>
    %c0_3 = arith.constant 0 : index
    %c0_4 = arith.constant 0 : index
    %4 = vector.load %arg3[%c0_3, %c0_4] : memref<1x80xf32, #tpu.memory_space<vmem>>, vector<1x80xf32>
    %5 = vector.broadcast %4 : vector<1x80xf32> to vector<8x80xf32>
    %6 = arith.addf %3, %5 : vector<8x80xf32>
    %cst_5 = arith.constant dense<0xFF800000> : vector<8xf32>
    %7 = vector.multi_reduction <maximumf>, %6, %cst_5 [1] : vector<8x80xf32> to vector<8xf32>
    %8 = vector.shape_cast %7 : vector<8xf32> to vector<8x1xf32>
    %9 = vector.broadcast %8 : vector<8x1xf32> to vector<8x80xf32>
    %10 = arith.subf %6, %9 : vector<8x80xf32>
    %11 = math.exp %10 : vector<8x80xf32>
    %cst_6 = arith.constant dense<0.000000e+00> : vector<8xf32>
    %12 = vector.multi_reduction <add>, %11, %cst_6 [1] : vector<8x80xf32> to vector<8xf32>
    %13 = vector.shape_cast %12 : vector<8xf32> to vector<8x1xf32>
    %14 = tpu.reciprocal %13 {approx = true} : vector<8x1xf32> -> vector<8x1xf32>
    %15 = vector.broadcast %14 : vector<8x1xf32> to vector<8x80xf32>
    %16 = arith.mulf %11, %15 : vector<8x80xf32>
    %c0_7 = arith.constant 0 : index
    %c0_8 = arith.constant 0 : index
    %17 = vector.load %arg4[%c0_7, %c0_8] : memref<8x80xf32, #tpu.memory_space<vmem>>, vector<8x80xf32>
    tpu.vector_store %arg4[%c0_7, %c0_8], %16 {strides = array<i32>} : memref<8x80xf32, #tpu.memory_space<vmem>>, vector<8x80xf32>,
    return
  }
  func.func @transform_0(%arg0: i32) -> (i32, i32) {
    %c0_i32 = arith.constant 0 : i32
    %c0_i32_0 = arith.constant 0 : i32
    return %arg0, %c0_i32 : i32, i32
  }
  func.func @transform_1(%arg0: i32) -> (i32, i32) {
    %c0_i32 = arith.constant 0 : i32
    %c0_i32_0 = arith.constant 0 : i32
    %c0_i32_1 = arith.constant 0 : i32
    return %c0_i32, %c0_i32_0 : i32, i32
  }
  func.func @transform_2(%arg0: i32) -> (i32, i32) {
    %c0_i32 = arith.constant 0 : i32
    %c0_i32_0 = arith.constant 0 : i32
    %c0_i32_1 = arith.constant 0 : i32
    return %c0_i32, %c0_i32_0 : i32, i32
  }
  func.func @transform_3(%arg0: i32) -> (i32, i32) {
    %c0_i32 = arith.constant 0 : i32
    %c0_i32_0 = arith.constant 0 : i32
    return %arg0, %c0_i32 : i32, i32
  }
}

module attributes {stable_mosaic.version = 11 : i64} {
  func.func @_ctc_head_kernel(%arg0: i32, %arg1: memref<8x32xf32, #tpu.memory_space<vmem>>, %arg2: memref<32x80xbf16, #tpu.memory_space<vmem>>, %arg3: memref<1x80xf32, #tpu.memory_space<vmem>>, %arg4: memref<8x80xf32, #tpu.memory_space<vmem>>) attributes {dimension_semantics = [#tpu.dimension_semantics<parallel>], iteration_bounds = array<i64: 2>, scalar_prefetch = 0 : i64, scratch_operands = 0 : i64, tpu.core_type = #tpu.core_type<tc>, window_params = [{transform_indices = @transform_0, window_bounds = array<i64: 8, 32>}, {pipeline_mode = #tpu.pipeline_mode<synchronous>, transform_indices = @transform_1, window_bounds = array<i64: 32, 80>}, {pipeline_mode = #tpu.pipeline_mode<synchronous>, transform_indices = @transform_2, window_bounds = array<i64: 1, 80>}, {transform_indices = @transform_3, window_bounds = array<i64: 8, 80>}]} {
    %c0 = arith.constant 0 : index
    %c0_0 = arith.constant 0 : index
    %0 = vector.load %arg1[%c0, %c0_0] : memref<8x32xf32, #tpu.memory_space<vmem>>, vector<8x32xf32>
    %1 = arith.truncf %0 : vector<8x32xf32> to vector<8x32xbf16>
    %c0_1 = arith.constant 0 : index
    %c0_2 = arith.constant 0 : index
    %2 = vector.load %arg2[%c0_1, %c0_2] : memref<32x80xbf16, #tpu.memory_space<vmem>>, vector<32x80xbf16>
    %cst = arith.constant dense<0.000000e+00> : vector<8x80xf32>
    %3 = tpu.matmul %1, %2, %cst {dimension_numbers = #tpu.dot_dimension_numbers<[1], [0], [0], [1], [0, 0, 1, 1], [], []>} : vector<8x32xbf16>, vector<32x80xbf16>, vector<8x80xf32> -> vector<8x80xf32>
    %c0_3 = arith.constant 0 : index
    %c0_4 = arith.constant 0 : index
    %4 = vector.load %arg3[%c0_3, %c0_4] : memref<1x80xf32, #tpu.memory_space<vmem>>, vector<1x80xf32>
    %5 = vector.broadcast %4 : vector<1x80xf32> to vector<8x80xf32>
    %6 = arith.addf %3, %5 : vector<8x80xf32>
    %cst_5 = arith.constant dense<0xFF800000> : vector<8xf32>
    %7 = vector.multi_reduction <maximumf>, %6, %cst_5 [1] : vector<8x80xf32> to vector<8xf32>
    %8 = vector.shape_cast %7 : vector<8xf32> to vector<8x1xf32>
    %9 = vector.broadcast %8 : vector<8x1xf32> to vector<8x80xf32>
    %10 = arith.subf %6, %9 : vector<8x80xf32>
    %11 = math.exp %10 : vector<8x80xf32>
    %cst_6 = arith.constant dense<0.000000e+00> : vector<8xf32>
    %12 = vector.multi_reduction <add>, %11, %cst_6 [1] : vector<8x80xf32> to vector<8xf32>
    %13 = vector.shape_cast %12 : vector<8xf32> to vector<8x1xf32>
    %14 = tpu.reciprocal %13 {approx = true} : vector<8x1xf32> -> vector<8x1xf32>
    %15 = vector.broadcast %14 : vector<8x1xf32> to vector<8x80xf32>
    %16 = arith.mulf %11, %15 : vector<8x80xf32>
    %c0_7 = arith.constant 0 : index
    %c0_8 = arith.constant 0 : index
    %17 = vector.load %arg4[%c0_7, %c0_8] : memref<8x80xf32, #tpu.memory_space<vmem>>, vector<8x80xf32>
    tpu.vector_store %arg4[%c0_7, %c0_8], %16 {strides = array<i32>} : memref<8x80xf32, #tpu.memory_space<vmem>>, vector<8x80xf32>,
    return
  }
  func.func @transform_0(%arg0: i32) -> (i32, i32) {
    %c0_i32 = arith.constant 0 : i32
    %c0_i32_0 = arith.constant 0 : i32
    return %arg0, %c0_i32 : i32, i32
  }
  func.func @transform_1(%arg0: i32) -> (i32, i32) {
    %c0_i32 = arith.constant 0 : i32
    %c0_i32_0 = arith.constant 0 : i32
    %c0_i32_1 = arith.constant 0 : i32
    return %c0_i32, %c0_i32_0 : i32, i32
  }
  func.func @transform_2(%arg0: i32) -> (i32, i32) {
    %c0_i32 = arith.constant 0 : i32
    %c0_i32_0 = arith.constant 0 : i32
    %c0_i32_1 = arith.constant 0 : i32
    return %c0_i32, %c0_i32_0 : i32, i32
  }
  func.func @transform_3(%arg0: i32) -> (i32, i32) {
    %c0_i32 = arith.constant 0 : i32
    %c0_i32_0 = arith.constant 0 : i32
    return %arg0, %c0_i32 : i32, i32
  }
}

</mosaic_0001>

<llo_original>
// kernel: tpu_custom_call.1
$region0: #{tpu_custom_call.1}
  #allocation0 [shape = 'u32[]', space=smem, size = 0x4, offset = 0x4, fixed_abs, tag = 'smem constant byte address 0x4 - core index']
  #allocation1 [shape = 'u32[144,128]{1,0:T(1,128)}', space=vmem, size = 0x12000, scoped, tag = 'internal scratch']
  %s0 = inlined_call_operand.hbm [shape: f32[16,32], index: 0, kind: input, shape index: {}]
  %s1 = inlined_call_operand.hbm [shape: bf16[32,80], index: 1, kind: input, shape index: {}]
  %s2 = inlined_call_operand.vmem [shape: f32[1,80], index: 2, kind: input, shape index: {}]
  %s3 = inlined_call_operand.hbm [shape: f32[16,80], index: 3, kind: output, shape index: {}]
  %s4 = sld [smem:[#allocation0]]
  $region53: #{tpu_custom_call.1} parent=0
    _
  %s6 = ssub.s32 1, %s4
  %s7 = scalar_select 0, %s6, %s4
  $region1: #{tpu_custom_call.1} parent=0
    #allocation2 [shape = 'u8[8192]{0}', space=vmem, size = 0x2000, scoped, tag = 'input window, operand 0']
    #allocation3 [shape = 's32[2]{0}', space=sflag, size = 0x8, scoped, tag = 'scoped memory for tpu_custom_call.1']
    #allocation4 [shape = 's32[2]{0}', space=sflag, size = 0x8, scoped, tag = 'scoped memory for tpu_custom_call.1']
    #allocation5 [shape = 'u8[8192]{0}', space=vmem, size = 0x2000, scoped, tag = 'input window, operand 1, single buffered']
    #allocation6 [shape = 's32[1]{0}', space=sflag, size = 0x4, scoped, tag = 'scoped memory for tpu_custom_call.1']
    #allocation7 [shape = 'u8[8192]{0}', space=vmem, size = 0x2000, scoped, tag = 'output window, operand 0']
    %8 = vsyncpa [#allocation3], 0
    %s9 = scalar_lea.sflag [#allocation3], 1
    %10 = vsyncpa %s9, 0
    %11 = vsyncpa [#allocation6], 0
    %12 = vsyncpa [#allocation4], 0
    %s13 = scalar_lea.sflag [#allocation4], 1
    %14 = vsyncpa %s13, 0
    loop: start=0, step=1, limit=4
    $region2: #{tpu_custom_call.1} parent=1 // loop_pre_header
      _
    $region3: #{tpu_custom_call.1} parent=1 // loop_header
      %s16 = sphi 0, %s20
      %p17 = scmp.ge.s32.totalorder %s16, 4
      %s26 = sphi 0, %s28
      %s29 = sphi 0, %s26
      %s30 = sphi 0, %s29
      %s46 = sphi 0, %s30
      %s50 = sphi 0, %s50
      %s52 = sphi 0, %s50
      %s53 = sphi 0, %s52
      %s67 = sphi 0, %s53
      %s71 = sphi 0, %s71
      %s73 = sphi 0, %s71
      %s74 = sphi 0, %s73
      %s88 = sphi 0, %s74
      %s94 = sphi 0, %s96
      %s97 = sphi 0, %s94
      %s98 = sphi 0, %s97
      %s114 = sphi 0, %s98
    $region4: #{tpu_custom_call.1} parent=1 // loop_header_branch
      %19 = sbr.rel (%p17) target = $region8
    $region5: #{tpu_custom_call.1} parent=1 // loop_body
      %s21 = ssub.s32 %s16, 1
      %s22 = ssub.s32 %s16, 2
      %s23 = sadd.s32 %s16, 1
      %s24 = ssub.s32 %s16, %s23
      %p25 = scmp.eq.s32.totalorder %s24, 0
      %s27 = sadd.s32 %s26, 1
      %s28 = scalar_select %p25, %s26, %s27
      %p31 = pneg %p25
      %p32 = scmp.eq.s32.totalorder %s16, 1
      %p33 = por %p31, %p32
      %p34 = scmp.ne.s32.totalorder %s26, %s29
      %p35 = scmp.eq.s32.totalorder %s16, 0
      %p36 = por %p34, %p35
      %p37 = scmp.ne.s32.totalorder %s26, %s29
      %p38 = scmp.eq.s32.totalorder %s21, 1
      %p39 = por %p37, %p38
      %p40 = scmp.ne.s32.totalorder %s29, %s30
      %p41 = scmp.eq.s32.totalorder %s21, 0
      %p42 = por %p40, %p41
      %p43 = scmp.ne.s32.totalorder %s29, %s30
      %p44 = scmp.eq.s32.totalorder %s22, 1
      %p45 = por %p43, %p44
      %p47 = scmp.ne.s32.totalorder %s30, %s46
      %p48 = scmp.eq.s32.totalorder %s22, 0
      %p49 = por %p47, %p48
      %s51 = sadd.s32 %s50, 1
      %p54 = scmp.eq.s32.totalorder %s16, 1
      %p55 = scmp.ne.s32.totalorder %s50, %s52
      %p56 = scmp.eq.s32.totalorder %s16, 0
      %p57 = por %p55, %p56
      %p58 = scmp.ne.s32.totalorder %s50, %s52
      %p59 = scmp.eq.s32.totalorder %s21, 1
      %p60 = por %p58, %p59
      %p61 = scmp.ne.s32.totalorder %s52, %s53
      %p62 = scmp.eq.s32.totalorder %s21, 0
      %p63 = por %p61, %p62
      %p64 = scmp.ne.s32.totalorder %s52, %s53
      %p65 = scmp.eq.s32.totalorder %s22, 1
      %p66 = por %p64, %p65
      %p68 = scmp.ne.s32.totalorder %s53, %s67
      %p69 = scmp.eq.s32.totalorder %s22, 0
      %p70 = por %p68, %p69
      %s72 = sadd.s32 %s71, 1
      %p75 = scmp.eq.s32.totalorder %s16, 1
      %p76 = scmp.ne.s32.totalorder %s71, %s73
      %p77 = scmp.eq.s32.totalorder %s16, 0
      %p78 = por %p76, %p77
      %p79 = scmp.ne.s32.totalorder %s71, %s73
      %p80 = scmp.eq.s32.totalorder %s21, 1
      %p81 = por %p79, %p80
      %p82 = scmp.ne.s32.totalorder %s73, %s74
      %p83 = scmp.eq.s32.totalorder %s21, 0
      %p84 = por %p82, %p83
      %p85 = scmp.ne.s32.totalorder %s73, %s74
      %p86 = scmp.eq.s32.totalorder %s22, 1
      %p87 = por %p85, %p86
      %p89 = scmp.ne.s32.totalorder %s74, %s88
      %p90 = scmp.eq.s32.totalorder %s22, 0
      %p91 = por %p89, %p90
      %s92 = ssub.s32 %s16, %s23
      %p93 = scmp.eq.s32.totalorder %s92, 0
      %s95 = sadd.s32 %s94, 1
      %s96 = scalar_select %p93, %s94, %s95
      %p99 = pneg %p93
      %p100 = scmp.eq.s32.totalorder %s16, 1
      %p101 = por %p99, %p100
      %p102 = scmp.ne.s32.totalorder %s94, %s97
      %p103 = scmp.eq.s32.totalorder %s16, 0
      %p104 = por %p102, %p103
      %p105 = scmp.ne.s32.totalorder %s94, %s97
      %p106 = scmp.eq.s32.totalorder %s21, 1
      %p107 = por %p105, %p106
      %p108 = scmp.ne.s32.totalorder %s97, %s98
      %p109 = scmp.eq.s32.totalorder %s21, 0
      %p110 = por %p108, %p109
      %p111 = scmp.ne.s32.totalorder %s97, %s98
      %p112 = scmp.eq.s32.totalorder %s22, 1
      %p113 = por %p111, %p112
      %p115 = scmp.ne.s32.totalorder %s98, %s114
      %p116 = scmp.eq.s32.totalorder %s22, 0
      %p117 = por %p115, %p116
      %p118 = scmp.le.s32.totalorder 1, %s16
      %p119 = scmp.lt.s32.totalorder %s16, 3
      %p120 = pnand %p118, %p119
      %p121 = pneg %p120
      // Predicated region
      $region9: #{tpu_custom_call.1} parent=5 // pred_check
        _
      $region10: #{tpu_custom_call.1} parent=5 // pred_check_branch
        %123 = sbr.rel (%p120) target = $region12
      $region11: #{tpu_custom_call.1} parent=5 // pred_region
        %s124 = ssub.s32 %s16, 1
        // Predicated region
        $region13: #{tpu_custom_call.1} parent=11 // pred_check
          %p125 = pneg %p63
        $region14: #{tpu_custom_call.1} parent=11 // pred_check_branch
          %127 = sbr.rel (%p125) target = $region16
        $region15: #{tpu_custom_call.1} parent=11 // pred_region
          %s129 = ssub.s32 256, 256
          %130 = vsyncadd [#allocation6], %s129
          %s131 = sshll.u32 [#allocation5], 4
          %s132 = int_to_ptr.vmem [resolvable:$true] %s131
          %137 = dma.hbm_to_vmem [thread:$0]  %s1, 256, %s132, [#allocation6], 64, 64, 4
        $region16: #{tpu_custom_call.1} parent=11 // pred_fallthru
          _
        // Predicated region
        $region17: #{tpu_custom_call.1} parent=11 // pred_check
          %p138 = pneg %p84
        $region18: #{tpu_custom_call.1} parent=11 // pred_check_branch
          %140 = sbr.rel (%p138) target = $region20
        $region19: #{tpu_custom_call.1} parent=11 // pred_region
          _
        $region20: #{tpu_custom_call.1} parent=11 // pred_fallthru
          _
      $region12: #{tpu_custom_call.1} parent=5 // pred_fallthru
        _
      %p141 = scmp.lt.s32.totalorder %s16, 2
      // Predicated region
      $region21: #{tpu_custom_call.1} parent=5 // pred_check
        %p142 = pneg %p141
      $region22: #{tpu_custom_call.1} parent=5 // pred_check_branch
        %144 = sbr.rel (%p142) target = $region24
      $region23: #{tpu_custom_call.1} parent=5 // pred_region
        // Predicated region
        $region25: #{tpu_custom_call.1} parent=23 // pred_check
          %p145 = pneg %p36
        $region26: #{tpu_custom_call.1} parent=23 // pred_check_branch
          %147 = sbr.rel (%p145) target = $region28
        $region27: #{tpu_custom_call.1} parent=23 // pred_region
          %s148 = sand.u32 %s26, 1
          %s149 = scalar_lea.sflag [#allocation3], %s148
          %s150 = sand.u32 %s26, 1
          %s151 = smul.addr %s150, 8
          %s152 = scalar_lea.vmem [#allocation2], %s151
          %s154 = ssub.s32 128, 128
          %155 = vsyncadd %s149, %s154
          %s156 = smul.addr %s16, 128
          %s157 = scalar_lea.hbm %s0, %s156
          %s159 = sshll.u32 %s152, 4
          %s160 = int_to_ptr.vmem [resolvable:$true] %s159
          %162 = dma.hbm_to_vmem [thread:$0]  %s157, 128, %s160, %s149
        $region28: #{tpu_custom_call.1} parent=23 // pred_fallthru
          _
      $region24: #{tpu_custom_call.1} parent=5 // pred_fallthru
        _
      %p163 = scmp.le.s32.totalorder 1, %s16
      %p164 = scmp.lt.s32.totalorder %s16, 3
      %p165 = pnand %p163, %p164
      %p166 = pneg %p165
      // Predicated region
      $region29: #{tpu_custom_call.1} parent=5 // pred_check
        _
      $region30: #{tpu_custom_call.1} parent=5 // pred_check_branch
        %168 = sbr.rel (%p165) target = $region32
      $region31: #{tpu_custom_call.1} parent=5 // pred_region
        %s169 = ssub.s32 %s16, 1
        %s170 = sand.u32 %s29, 1
        %s171 = scalar_lea.sflag [#allocation3], %s170
        %s172 = sand.u32 %s29, 1
        %s173 = smul.addr %s172, 8
        %s174 = scalar_lea.vmem [#allocation2], %s173
        // Predicated region
        $region33: #{tpu_custom_call.1} parent=31 // pred_check
          %p175 = pneg %p42
        $region34: #{tpu_custom_call.1} parent=31 // pred_check_branch
          %177 = sbr.rel (%p175) target = $region36
        $region35: #{tpu_custom_call.1} parent=31 // pred_region
          %178 = dma.done %s171, 128
        $region36: #{tpu_custom_call.1} parent=31 // pred_fallthru
          _
        // Predicated region
        $region37: #{tpu_custom_call.1} parent=31 // pred_check
          %p179 = pneg %p63
        $region38: #{tpu_custom_call.1} parent=31 // pred_check_branch
          %181 = sbr.rel (%p179) target = $region40
        $region39: #{tpu_custom_call.1} parent=31 // pred_region
          %182 = dma.done [#allocation6], 256
        $region40: #{tpu_custom_call.1} parent=31 // pred_fallthru
          _
        %s183 = sand.u32 %s29, 1
        %s184 = scalar_lea.sflag [#allocation3], %s183
        %s185 = sand.u32 %s29, 1
        %s186 = smul.addr %s185, 8
        %s187 = scalar_lea.vmem [#allocation2], %s186
        %p188 = pneg %p42
        %p189 = pneg %p39
        %p190 = pneg %p63
        %p191 = pneg %p60
        %p192 = pneg %p84
        %p193 = pneg %p81
        %p194 = pneg %p110
        %p195 = pneg %p107
        %s196 = sand.u32 %s97, 1
        %s197 = scalar_lea.sflag [#allocation4], %s196
        %s198 = sand.u32 %s97, 1
        %s199 = smul.addr %s198, 8
        %s200 = scalar_lea.vmem [#allocation7], %s199
        %v202 = vld [vmem:[%s174] sm:$0xff]
        %v203 = vpack.c.bf16 %v202, %v202
        %v204 = vld [vmem:[#allocation5] sm:$0xf]
        %v205 = vld [vmem:[#allocation5 + $0x4] sm:$0xf]
        %v206 = vld [vmem:[#allocation5 + $0x8] sm:$0xf]
        %v207 = vld [vmem:[#allocation5 + $0xc] sm:$0xf]
        %v208 = vld [vmem:[%s2] sm:$0x1]
        %v210 = vlaneseq
        %v211 = vshrl.u32 %v210, 7
        %v212 = vsub.s32 0, %v211
        %v213 = vrot.slane %v208, %v212
        %v219 = vunpack.c.l.b16 %v204
        %v220 = vunpack.c.l.b16 %v205
        %v221 = vunpack.c.l.b16 %v206
        %v222 = vunpack.c.l.b16 %v207
        %v223 = vpack.c.b16 %v220, %v219
        %v224 = vpack.c.b16 %v222, %v221
        %vm227 = vcmask 261120
        %v229 = vsel %vm227, %v203, 0
        %231 = vmatprep.subr.bf16.mxu0 0
        %232 = vmatpush1.bf16.msra.mxu0 0
        %233 = vmatprep.subr.bf16.mxu0 0
        %234 = vmatpush1.bf16.msra.mxu0 0
        %235 = vmatprep.subr.bf16.mxu0 0
        %236 = vmatpush1.bf16.msra.mxu0 0
        %237 = vmatprep.subr.bf16.mxu0 0
        %238 = vmatpush1.bf16.msra.mxu0 0
        %239 = vmatprep.subr.bf16.mxu0 0
        %240 = vmatpush1.bf16.msra.mxu0 0
        %241 = vmatprep.subr.bf16.mxu0 0
        %242 = vmatpush1.bf16.msra.mxu0 0
        %243 = vmatprep.subr.bf16.mxu0 0
        %244 = vmatpush1.bf16.msra.mxu0 %v224
        %245 = vmatprep.subr.bf16.mxu0 0
        %246 = vmatpush1.bf16.msra.mxu0 %v223
        %247 = vmatprep.subr.bf16.mxu0 0
        %248 = vmatpush2.bf16.msra.mxu0 0
        %249 = vmatprep.subr.bf16.mxu0 0
        %250 = vmatpush2.bf16.msra.mxu0 0
        %251 = vmatprep.subr.bf16.mxu0 0
        %252 = vmatpush2.bf16.msra.mxu0 0
        %253 = vmatprep.subr.bf16.mxu0 0
        %254 = vmatpush2.bf16.msra.mxu0 0
        %255 = vmatprep.subr.bf16.mxu0 0
        %256 = vmatpush2.bf16.msra.mxu0 0
        %257 = vmatprep.subr.bf16.mxu0 0
        %258 = vmatpush2.bf16.msra.mxu0 0
        %259 = vmatprep.subr.bf16.mxu0 0
        %260 = vmatpush2.bf16.msra.mxu0 0
        %261 = vmatprep.subr.bf16.mxu0 0
        %262 = vmatpush2.bf16.msra.mxu0 0
        %263 = vmatprep.mubr.bf16.mxu0 0
        %264 = vmatmul.mubr.bf16.gmra.mxu0 %v229
        %v265 = vpop.f32.mrf.mxu0
        %v266 = vadd.f32 %v213, %v265
        %v267 = vpop.f32.mrf.mxu0
        %v268 = vpop.f32.mrf.mxu0
        %v269 = vpop.f32.mrf.mxu0
        %270 = vdwg.mxu0
        %vm271 = vcmask 654336
        %v272 = vsel %vm271, %v266, -inf
        %273 = vmax.xlane.f32.xlu0 %v272
        %v274 = vpop.xlane.xlu0 %273
        %v275 = vsub.f32 %v266, %v274
        %v276 = vmul.f32 %v275, 1.442695
        %v277 = vpow.pop %v276
        %v278 = vsel %vm271, %v277, 0.0
        %279 = vadd.xlane.f32.xlu0 %v278
        %v280 = vpop.xlane.xlu0 %279
        %v281 = vrcp.pop %v280
        %v282 = vmul.f32 %v277, %v281
        %283 = vst.msk [vmem:[%s200] sm:$0xff] %vm271, %v282
        %s284 = sand.u32 %s97, 1
        %s285 = scalar_lea.sflag [#allocation4], %s284
        %s286 = sand.u32 %s97, 1
        %s287 = smul.addr %s286, 8
        %s288 = scalar_lea.vmem [#allocation7], %s287
        // Predicated region
        $region41: #{tpu_custom_call.1} parent=31 // pred_check
          %p289 = pneg %p107
        $region42: #{tpu_custom_call.1} parent=31 // pred_check_branch
          %291 = sbr.rel (%p289) target = $region44
        $region43: #{tpu_custom_call.1} parent=31 // pred_region
          %s293 = ssub.s32 128, 128
          %294 = vsyncadd %s285, %s293
          %s295 = smul.addr %s21, 128
          %s296 = scalar_lea.hbm %s3, %s295
          %s298 = sshll.u32 %s288, 4
          %s299 = int_to_ptr.vmem [resolvable:$true] %s298
          %301 = dma.vmem_to_hbm [thread:$0]  %s299, 128, %s296, %s285
        $region44: #{tpu_custom_call.1} parent=31 // pred_fallthru
          _
      $region32: #{tpu_custom_call.1} parent=5 // pred_fallthru
        _
      %p302 = scmp.le.s32.totalorder 2, %s16
      // Predicated region
      $region45: #{tpu_custom_call.1} parent=5 // pred_check
        %p303 = pneg %p302
      $region46: #{tpu_custom_call.1} parent=5 // pred_check_branch
        %305 = sbr.rel (%p303) target = $region48
      $region47: #{tpu_custom_call.1} parent=5 // pred_region
        %s306 = ssub.s32 %s16, 2
        // Predicated region
        $region49: #{tpu_custom_call.1} parent=47 // pred_check
          %p307 = pneg %p113
        $region50: #{tpu_custom_call.1} parent=47 // pred_check_branch
          %309 = sbr.rel (%p307) target = $region52
        $region51: #{tpu_custom_call.1} parent=47 // pred_region
          %s310 = sand.u32 %s98, 1
          %s311 = scalar_lea.sflag [#allocation4], %s310
          %s312 = sand.u32 %s98, 1
          %s313 = smul.addr %s312, 8
          %s314 = scalar_lea.vmem [#allocation7], %s313
          %315 = dma.done %s311, 128
        $region52: #{tpu_custom_call.1} parent=47 // pred_fallthru
          _
      $region48: #{tpu_custom_call.1} parent=5 // pred_fallthru
        _
    $region6: #{tpu_custom_call.1} parent=1 // loop_footer
      %s20 = sadd.s32 1, %s16
    $region7: #{tpu_custom_call.1} parent=1 // loop_footer_branch
      %15 = sbr.rel target = $region3
    $region8: #{tpu_custom_call.1} parent=1 // loop_exit
      _
    %316 = vsyncpa [#allocation3], 1
    %s317 = scalar_lea.sflag [#allocation3], 1
    %318 = vsyncpa %s317, 1
    %319 = vsyncpa [#allocation6], 1
    %320 = vsyncpa [#allocation4], 1
    %s321 = scalar_lea.sflag [#allocation4], 1
    %322 = vsyncpa %s321, 1

// kernel: tpu_custom_call.1
$region0: #{tpu_custom_call.1}
  #allocation0 [shape = 'u32[]', space=smem, size = 0x4, offset = 0x4, fixed_abs, tag = 'smem constant byte address 0x4 - core index']
  #allocation1 [shape = 'u32[144,128]{1,0:T(1,128)}', space=vmem, size = 0x12000, scoped, tag = 'internal scratch']
  %s0 = inlined_call_operand.hbm [shape: f32[16,32], index: 0, kind: input, shape index: {}]
  %s1 = inlined_call_operand.hbm [shape: bf16[32,80], index: 1, kind: input, shape index: {}]
  %s2 = inlined_call_operand.vmem [shape: f32[1,80], index: 2, kind: input, shape index: {}]
  %s3 = inlined_call_operand.hbm [shape: f32[16,80], index: 3, kind: output, shape index: {}]
  %s4 = sld [smem:[#allocation0]]
  $region53: #{tpu_custom_call.1} parent=0
    _
  %s6 = ssub.s32 1, %s4
  %s7 = scalar_select 0, %s6, %s4
  $region1: #{tpu_custom_call.1} parent=0
    #allocation2 [shape = 'u8[8192]{0}', space=vmem, size = 0x2000, scoped, tag = 'input window, operand 0']
    #allocation3 [shape = 's32[2]{0}', space=sflag, size = 0x8, scoped, tag = 'scoped memory for tpu_custom_call.1']
    #allocation4 [shape = 's32[2]{0}', space=sflag, size = 0x8, scoped, tag = 'scoped memory for tpu_custom_call.1']
    #allocation5 [shape = 'u8[8192]{0}', space=vmem, size = 0x2000, scoped, tag = 'input window, operand 1, single buffered']
    #allocation6 [shape = 's32[1]{0}', space=sflag, size = 0x4, scoped, tag = 'scoped memory for tpu_custom_call.1']
    #allocation7 [shape = 'u8[8192]{0}', space=vmem, size = 0x2000, scoped, tag = 'output window, operand 0']
    %8 = vsyncpa [#allocation3], 0
    %s9 = scalar_lea.sflag [#allocation3], 1
    %10 = vsyncpa %s9, 0
    %11 = vsyncpa [#allocation6], 0
    %12 = vsyncpa [#allocation4], 0
    %s13 = scalar_lea.sflag [#allocation4], 1
    %14 = vsyncpa %s13, 0
    loop: start=0, step=1, limit=4
    $region2: #{tpu_custom_call.1} parent=1 // loop_pre_header
      _
    $region3: #{tpu_custom_call.1} parent=1 // loop_header
      %s16 = sphi 0, %s20
      %p17 = scmp.ge.s32.totalorder %s16, 4
      %s26 = sphi 0, %s28
      %s29 = sphi 0, %s26
      %s30 = sphi 0, %s29
      %s46 = sphi 0, %s30
      %s50 = sphi 0, %s50
      %s52 = sphi 0, %s50
      %s53 = sphi 0, %s52
      %s67 = sphi 0, %s53
      %s71 = sphi 0, %s71
      %s73 = sphi 0, %s71
      %s74 = sphi 0, %s73
      %s88 = sphi 0, %s74
      %s94 = sphi 0, %s96
      %s97 = sphi 0, %s94
      %s98 = sphi 0, %s97
      %s114 = sphi 0, %s98
    $region4: #{tpu_custom_call.1} parent=1 // loop_header_branch
      %19 = sbr.rel (%p17) target = $region8
    $region5: #{tpu_custom_call.1} parent=1 // loop_body
      %s21 = ssub.s32 %s16, 1
      %s22 = ssub.s32 %s16, 2
      %s23 = sadd.s32 %s16, 1
      %s24 = ssub.s32 %s16, %s23
      %p25 = scmp.eq.s32.totalorder %s24, 0
      %s27 = sadd.s32 %s26, 1
      %s28 = scalar_select %p25, %s26, %s27
      %p31 = pneg %p25
      %p32 = scmp.eq.s32.totalorder %s16, 1
      %p33 = por %p31, %p32
      %p34 = scmp.ne.s32.totalorder %s26, %s29
      %p35 = scmp.eq.s32.totalorder %s16, 0
      %p36 = por %p34, %p35
      %p37 = scmp.ne.s32.totalorder %s26, %s29
      %p38 = scmp.eq.s32.totalorder %s21, 1
      %p39 = por %p37, %p38
      %p40 = scmp.ne.s32.totalorder %s29, %s30
      %p41 = scmp.eq.s32.totalorder %s21, 0
      %p42 = por %p40, %p41
      %p43 = scmp.ne.s32.totalorder %s29, %s30
      %p44 = scmp.eq.s32.totalorder %s22, 1
      %p45 = por %p43, %p44
      %p47 = scmp.ne.s32.totalorder %s30, %s46
      %p48 = scmp.eq.s32.totalorder %s22, 0
      %p49 = por %p47, %p48
      %s51 = sadd.s32 %s50, 1
      %p54 = scmp.eq.s32.totalorder %s16, 1
      %p55 = scmp.ne.s32.totalorder %s50, %s52
      %p56 = scmp.eq.s32.totalorder %s16, 0
      %p57 = por %p55, %p56
      %p58 = scmp.ne.s32.totalorder %s50, %s52
      %p59 = scmp.eq.s32.totalorder %s21, 1
      %p60 = por %p58, %p59
      %p61 = scmp.ne.s32.totalorder %s52, %s53
      %p62 = scmp.eq.s32.totalorder %s21, 0
      %p63 = por %p61, %p62
      %p64 = scmp.ne.s32.totalorder %s52, %s53
      %p65 = scmp.eq.s32.totalorder %s22, 1
      %p66 = por %p64, %p65
      %p68 = scmp.ne.s32.totalorder %s53, %s67
      %p69 = scmp.eq.s32.totalorder %s22, 0
      %p70 = por %p68, %p69
      %s72 = sadd.s32 %s71, 1
      %p75 = scmp.eq.s32.totalorder %s16, 1
      %p76 = scmp.ne.s32.totalorder %s71, %s73
      %p77 = scmp.eq.s32.totalorder %s16, 0
      %p78 = por %p76, %p77
      %p79 = scmp.ne.s32.totalorder %s71, %s73
      %p80 = scmp.eq.s32.totalorder %s21, 1
      %p81 = por %p79, %p80
      %p82 = scmp.ne.s32.totalorder %s73, %s74
      %p83 = scmp.eq.s32.totalorder %s21, 0
      %p84 = por %p82, %p83
      %p85 = scmp.ne.s32.totalorder %s73, %s74
      %p86 = scmp.eq.s32.totalorder %s22, 1
      %p87 = por %p85, %p86
      %p89 = scmp.ne.s32.totalorder %s74, %s88
      %p90 = scmp.eq.s32.totalorder %s22, 0
      %p91 = por %p89, %p90
      %s92 = ssub.s32 %s16, %s23
      %p93 = scmp.eq.s32.totalorder %s92, 0
      %s95 = sadd.s32 %s94, 1
      %s96 = scalar_select %p93, %s94, %s95
      %p99 = pneg %p93
      %p100 = scmp.eq.s32.totalorder %s16, 1
      %p101 = por %p99, %p100
      %p102 = scmp.ne.s32.totalorder %s94, %s97
      %p103 = scmp.eq.s32.totalorder %s16, 0
      %p104 = por %p102, %p103
      %p105 = scmp.ne.s32.totalorder %s94, %s97
      %p106 = scmp.eq.s32.totalorder %s21, 1
      %p107 = por %p105, %p106
      %p108 = scmp.ne.s32.totalorder %s97, %s98
      %p109 = scmp.eq.s32.totalorder %s21, 0
      %p110 = por %p108, %p109
      %p111 = scmp.ne.s32.totalorder %s97, %s98
      %p112 = scmp.eq.s32.totalorder %s22, 1
      %p113 = por %p111, %p112
      %p115 = scmp.ne.s32.totalorder %s98, %s114
      %p116 = scmp.eq.s32.totalorder %s22, 0
      %p117 = por %p115, %p116
      %p118 = scmp.le.s32.totalorder 1, %s16
      %p119 = scmp.lt.s32.totalorder %s16, 3
      %p120 = pnand %p118, %p119
      %p121 = pneg %p120
      // Predicated region
      $region9: #{tpu_custom_call.1} parent=5 // pred_check
        _
      $region10: #{tpu_custom_call.1} parent=5 // pred_check_branch
        %123 = sbr.rel (%p120) target = $region12
      $region11: #{tpu_custom_call.1} parent=5 // pred_region
        %s124 = ssub.s32 %s16, 1
        // Predicated region
        $region13: #{tpu_custom_call.1} parent=11 // pred_check
          %p125 = pneg %p63
        $region14: #{tpu_custom_call.1} parent=11 // pred_check_branch
          %127 = sbr.rel (%p125) target = $region16
        $region15: #{tpu_custom_call.1} parent=11 // pred_region
          %s129 = ssub.s32 256, 256
          %130 = vsyncadd [#allocation6], %s129
          %s131 = sshll.u32 [#allocation5], 4
          %s132 = int_to_ptr.vmem [resolvable:$true] %s131
          %137 = dma.hbm_to_vmem [thread:$0]  %s1, 256, %s132, [#allocation6], 64, 64, 4
        $region16: #{tpu_custom_call.1} parent=11 // pred_fallthru
          _
        // Predicated region
        $region17: #{tpu_custom_call.1} parent=11 // pred_check
          %p138 = pneg %p84
        $region18: #{tpu_custom_call.1} parent=11 // pred_check_branch
          %140 = sbr.rel (%p138) target = $region20
        $region19: #{tpu_custom_call.1} parent=11 // pred_region
          _
        $region20: #{tpu_custom_call.1} parent=11 // pred_fallthru
          _
      $region12: #{tpu_custom_call.1} parent=5 // pred_fallthru
        _
      %p141 = scmp.lt.s32.totalorder %s16, 2
      // Predicated region
      $region21: #{tpu_custom_call.1} parent=5 // pred_check
        %p142 = pneg %p141
      $region22: #{tpu_custom_call.1} parent=5 // pred_check_branch
        %144 = sbr.rel (%p142) target = $region24
      $region23: #{tpu_custom_call.1} parent=5 // pred_region
        // Predicated region
        $region25: #{tpu_custom_call.1} parent=23 // pred_check
          %p145 = pneg %p36
        $region26: #{tpu_custom_call.1} parent=23 // pred_check_branch
          %147 = sbr.rel (%p145) target = $region28
        $region27: #{tpu_custom_call.1} parent=23 // pred_region
          %s148 = sand.u32 %s26, 1
          %s149 = scalar_lea.sflag [#allocation3], %s148
          %s150 = sand.u32 %s26, 1
          %s151 = smul.addr %s150, 8
          %s152 = scalar_lea.vmem [#allocation2], %s151
          %s154 = ssub.s32 128, 128
          %155 = vsyncadd %s149, %s154
          %s156 = smul.addr %s16, 128
          %s157 = scalar_lea.hbm %s0, %s156
          %s159 = sshll.u32 %s152, 4
          %s160 = int_to_ptr.vmem [resolvable:$true] %s159
          %162 = dma.hbm_to_vmem [thread:$0]  %s157, 128, %s160, %s149
        $region28: #{tpu_custom_call.1} parent=23 // pred_fallthru
          _
      $region24: #{tpu_custom_call.1} parent=5 // pred_fallthru
        _
      %p163 = scmp.le.s32.totalorder 1, %s16
      %p164 = scmp.lt.s32.totalorder %s16, 3
      %p165 = pnand %p163, %p164
      %p166 = pneg %p165
      // Predicated region
      $region29: #{tpu_custom_call.1} parent=5 // pred_check
        _
      $region30: #{tpu_custom_call.1} parent=5 // pred_check_branch
        %168 = sbr.rel (%p165) target = $region32
      $region31: #{tpu_custom_call.1} parent=5 // pred_region
        %s169 = ssub.s32 %s16, 1
        %s170 = sand.u32 %s29, 1
        %s171 = scalar_lea.sflag [#allocation3], %s170
        %s172 = sand.u32 %s29, 1
        %s173 = smul.addr %s172, 8
        %s174 = scalar_lea.vmem [#allocation2], %s173
        // Predicated region
        $region33: #{tpu_custom_call.1} parent=31 // pred_check
          %p175 = pneg %p42
        $region34: #{tpu_custom_call.1} parent=31 // pred_check_branch
          %177 = sbr.rel (%p175) target = $region36
        $region35: #{tpu_custom_call.1} parent=31 // pred_region
          %178 = dma.done %s171, 128
        $region36: #{tpu_custom_call.1} parent=31 // pred_fallthru
          _
        // Predicated region
        $region37: #{tpu_custom_call.1} parent=31 // pred_check
          %p179 = pneg %p63
        $region38: #{tpu_custom_call.1} parent=31 // pred_check_branch
          %181 = sbr.rel (%p179) target = $region40
        $region39: #{tpu_custom_call.1} parent=31 // pred_region
          %182 = dma.done [#allocation6], 256
        $region40: #{tpu_custom_call.1} parent=31 // pred_fallthru
          _
        %s183 = sand.u32 %s29, 1
        %s184 = scalar_lea.sflag [#allocation3], %s183
        %s185 = sand.u32 %s29, 1
        %s186 = smul.addr %s185, 8
        %s187 = scalar_lea.vmem [#allocation2], %s186
        %p188 = pneg %p42
        %p189 = pneg %p39
        %p190 = pneg %p63
        %p191 = pneg %p60
        %p192 = pneg %p84
        %p193 = pneg %p81
        %p194 = pneg %p110
        %p195 = pneg %p107
        %s196 = sand.u32 %s97, 1
        %s197 = scalar_lea.sflag [#allocation4], %s196
        %s198 = sand.u32 %s97, 1
        %s199 = smul.addr %s198, 8
        %s200 = scalar_lea.vmem [#allocation7], %s199
        %v202 = vld [vmem:[%s174] sm:$0xff]
        %v203 = vpack.c.bf16 %v202, %v202
        %v204 = vld [vmem:[#allocation5] sm:$0xf]
        %v205 = vld [vmem:[#allocation5 + $0x4] sm:$0xf]
        %v206 = vld [vmem:[#allocation5 + $0x8] sm:$0xf]
        %v207 = vld [vmem:[#allocation5 + $0xc] sm:$0xf]
        %v208 = vld [vmem:[%s2] sm:$0x1]
        %v210 = vlaneseq
        %v211 = vshrl.u32 %v210, 7
        %v212 = vsub.s32 0, %v211
        %v213 = vrot.slane %v208, %v212
        %v219 = vunpack.c.l.b16 %v204
        %v220 = vunpack.c.l.b16 %v205
        %v221 = vunpack.c.l.b16 %v206
        %v222 = vunpack.c.l.b16 %v207
        %v223 = vpack.c.b16 %v220, %v219
        %v224 = vpack.c.b16 %v222, %v221
        %vm227 = vcmask 261120
        %v229 = vsel %vm227, %v203, 0
        %231 = vmatprep.subr.bf16.mxu0 0
        %232 = vmatpush1.bf16.msra.mxu0 0
        %233 = vmatprep.subr.bf16.mxu0 0
        %234 = vmatpush1.bf16.msra.mxu0 0
        %235 = vmatprep.subr.bf16.mxu0 0
        %236 = vmatpush1.bf16.msra.mxu0 0
        %237 = vmatprep.subr.bf16.mxu0 0
        %238 = vmatpush1.bf16.msra.mxu0 0
        %239 = vmatprep.subr.bf16.mxu0 0
        %240 = vmatpush1.bf16.msra.mxu0 0
        %241 = vmatprep.subr.bf16.mxu0 0
        %242 = vmatpush1.bf16.msra.mxu0 0
        %243 = vmatprep.subr.bf16.mxu0 0
        %244 = vmatpush1.bf16.msra.mxu0 %v224
        %245 = vmatprep.subr.bf16.mxu0 0
        %246 = vmatpush1.bf16.msra.mxu0 %v223
        %247 = vmatprep.subr.bf16.mxu0 0
        %248 = vmatpush2.bf16.msra.mxu0 0
        %249 = vmatprep.subr.bf16.mxu0 0
        %250 = vmatpush2.bf16.msra.mxu0 0
        %251 = vmatprep.subr.bf16.mxu0 0
        %252 = vmatpush2.bf16.msra.mxu0 0
        %253 = vmatprep.subr.bf16.mxu0 0
        %254 = vmatpush2.bf16.msra.mxu0 0
        %255 = vmatprep.subr.bf16.mxu0 0
        %256 = vmatpush2.bf16.msra.mxu0 0
        %257 = vmatprep.subr.bf16.mxu0 0
        %258 = vmatpush2.bf16.msra.mxu0 0
        %259 = vmatprep.subr.bf16.mxu0 0
        %260 = vmatpush2.bf16.msra.mxu0 0
        %261 = vmatprep.subr.bf16.mxu0 0
        %262 = vmatpush2.bf16.msra.mxu0 0
        %263 = vmatprep.mubr.bf16.mxu0 0
        %264 = vmatmul.mubr.bf16.gmra.mxu0 %v229
        %v265 = vpop.f32.mrf.mxu0
        %v266 = vadd.f32 %v213, %v265
        %v267 = vpop.f32.mrf.mxu0
        %v268 = vpop.f32.mrf.mxu0
        %v269 = vpop.f32.mrf.mxu0
        %270 = vdwg.mxu0
        %vm271 = vcmask 654336
        %v272 = vsel %vm271, %v266, -inf
        %273 = vmax.xlane.f32.xlu0 %v272
        %v274 = vpop.xlane.xlu0 %273
        %v275 = vsub.f32 %v266, %v274
        %v276 = vmul.f32 %v275, 1.442695
        %v277 = vpow.pop %v276
        %v278 = vsel %vm271, %v277, 0.0
        %279 = vadd.xlane.f32.xlu0 %v278
        %v280 = vpop.xlane.xlu0 %279
        %v281 = vrcp.pop %v280
        %v282 = vmul.f32 %v277, %v281
        %283 = vst.msk [vmem:[%s200] sm:$0xff] %vm271, %v282
        %s284 = sand.u32 %s97, 1
        %s285 = scalar_lea.sflag [#allocation4], %s284
        %s286 = sand.u32 %s97, 1
        %s287 = smul.addr %s286, 8
        %s288 = scalar_lea.vmem [#allocation7], %s287
        // Predicated region
        $region41: #{tpu_custom_call.1} parent=31 // pred_check
          %p289 = pneg %p107
        $region42: #{tpu_custom_call.1} parent=31 // pred_check_branch
          %291 = sbr.rel (%p289) target = $region44
        $region43: #{tpu_custom_call.1} parent=31 // pred_region
          %s293 = ssub.s32 128, 128
          %294 = vsyncadd %s285, %s293
          %s295 = smul.addr %s21, 128
          %s296 = scalar_lea.hbm %s3, %s295
          %s298 = sshll.u32 %s288, 4
          %s299 = int_to_ptr.vmem [resolvable:$true] %s298
          %301 = dma.vmem_to_hbm [thread:$0]  %s299, 128, %s296, %s285
        $region44: #{tpu_custom_call.1} parent=31 // pred_fallthru
          _
      $region32: #{tpu_custom_call.1} parent=5 // pred_fallthru
        _
      %p302 = scmp.le.s32.totalorder 2, %s16
      // Predicated region
      $region45: #{tpu_custom_call.1} parent=5 // pred_check
        %p303 = pneg %p302
      $region46: #{tpu_custom_call.1} parent=5 // pred_check_branch
        %305 = sbr.rel (%p303) target = $region48
      $region47: #{tpu_custom_call.1} parent=5 // pred_region
        %s306 = ssub.s32 %s16, 2
        // Predicated region
        $region49: #{tpu_custom_call.1} parent=47 // pred_check
          %p307 = pneg %p113
        $region50: #{tpu_custom_call.1} parent=47 // pred_check_branch
          %309 = sbr.rel (%p307) target = $region52
        $region51: #{tpu_custom_call.1} parent=47 // pred_region
          %s310 = sand.u32 %s98, 1
          %s311 = scalar_lea.sflag [#allocation4], %s310
          %s312 = sand.u32 %s98, 1
          %s313 = smul.addr %s312, 8
          %s314 = scalar_lea.vmem [#allocation7], %s313
          %315 = dma.done %s311, 128
        $region52: #{tpu_custom_call.1} parent=47 // pred_fallthru
          _
      $region48: #{tpu_custom_call.1} parent=5 // pred_fallthru
        _
    $region6: #{tpu_custom_call.1} parent=1 // loop_footer
      %s20 = sadd.s32 1, %s16
    $region7: #{tpu_custom_call.1} parent=1 // loop_footer_branch
      %15 = sbr.rel target = $region3
    $region8: #{tpu_custom_call.1} parent=1 // loop_exit
      _
    %316 = vsyncpa [#allocation3], 1
    %s317 = scalar_lea.sflag [#allocation3], 1
    %318 = vsyncpa %s317, 1
    %319 = vsyncpa [#allocation6], 1
    %320 = vsyncpa [#allocation4], 1
    %s321 = scalar_lea.sflag [#allocation4], 1
    %322 = vsyncpa %s321, 1

</llo_original>
